<compile_context>
chip_gen: v5e
topology: v5e:2x2
jax: 0.10.0
libtpu: 0.0.40
codegen_flags: <defaults>
</compile_context>

<pallas_src>
import functools

import jax
import jax.numpy as jnp
from jax.experimental import pallas as pl
from jax.experimental.pallas import tpu as pltpu

_SMALL_PROBLEM_BYTES = 256 * 1024  # below this, plain XLA beats any kernel


def _critic_kernel(x_ref, w1_ref, b1_ref, w2_ref, b2_ref, o_ref, *, tile_b, batch):
    i = pl.program_id(0)

    # ---- fc1 on the MXU, transposed so batch is the lane (N) dimension ----
    #   h1T = W1 (hh, hsq) . x_tile^T (hsq, tile_b) -> (hh, tile_b), f32 accumulate.
    xb = x_ref[...].astype(jnp.bfloat16)                 # cast in VMEM (hides under DMA)
    h1t = jax.lax.dot_general(
        w1_ref[...], xb,
        dimension_numbers=(((1,), (1,)), ((), ())),      # contract hsq of both operands
        preferred_element_type=jnp.float32)              # (hh, tile_b)
    h1t = jnp.maximum(h1t + b1_ref[...], 0.0)            # bias + relu, lane-dense

    # ---- fc2 (out_features = 1): VPU multiply + sublane reduce, lane-dense ----
    z = jnp.sum(h1t * w2_ref[...], axis=0, keepdims=True) + b2_ref[...]   # (1, tile_b)

    # numerically stable softplus: log1p(exp(-|z|)) + max(z, 0)
    sp = jnp.log1p(jnp.exp(-jnp.abs(z))) + jnp.maximum(z, 0.0)

    # mask garbage lanes of the (possibly ragged) last block before summing;
    # jnp.where fully discards the masked branch, so garbage/NaN rows never leak.
    col = jax.lax.broadcasted_iota(jnp.int32, (1, tile_b), 1)
    valid = batch - i * tile_b
    sp = jnp.where(col < valid, sp, 0.0)

    # per-block partial sum, broadcast to a lane-dense unmasked full-vreg store
    part = jnp.sum(sp)
    o_ref[...] = jnp.full((1, 8, 128), part, dtype=jnp.float32)


def _round_up(x, m):
    return ((x + m - 1) // m) * m


def _vmem_limit_bytes():
    """Generation-aware scoped-VMEM limit (~75% of physical per-core VMEM)."""
    try:
        cap = int(pltpu.get_tpu_info().vmem_capacity_bytes)
    except Exception:
        cap = 0
    if cap <= 0:
        cap = 64 * 1024 * 1024            # conservative default: v7x per-TC VMEM
    return min(cap * 3 // 4, 96 * 1024 * 1024)


def _pick_tile_b(batch, hsq, hh, vmem_limit):
    """Largest batch tile that fits ~70% of the scoped-VMEM budget, capped so the
    'parallel' grid has >=2 steps (v7x megacore) when the batch is big enough."""
    hsq_l = _round_up(hsq, 128)           # lane padding of x tile / weight rows
    hh_s8 = _round_up(hh, 8)              # f32 sublane padding
    hh_s16 = _round_up(hh, 16)            # bf16 sublane padding
    # Constant-index (resident) operands are still double-buffered by Pallas.
    fixed = 2 * (hh_s16 * hsq_l * 2       # w1 bf16
                 + 2 * hh_s8 * 128 * 4    # b1, w2 as (hh, 1) -> lane padded f32
                 + 8 * 128 * 4            # b2
                 + 8 * 128 * 4)           # (1, 8, 128) output block
    budget = int(vmem_limit * 0.7) - fixed
    per_row = (2 * hsq_l * 4              # double-buffered f32 x tile (lane padded)
               + hsq_l * 2                # in-VMEM bf16 copy fed to the MXU
               + 2 * hh_s8 * 4)           # h1T and the h1T*w2 temporary, per column
    fit = max(8, budget // max(per_row, 1))
    half = _round_up((batch + 1) // 2, 8)  # >=2 grid steps for v7x's two TCs
    tb = min(fit, half, 2048, _round_up(batch, 8))
    if tb >= 128:
        tb = (tb // 128) * 128             # lane-align the (hh, tile_b) temporaries
    else:
        tb = _round_up(tb, 8)
    return int(tb)


def prepare_params(w1, b1, w2, b2):
    """One-time parameter prep (hoisted out of the per-call forward path)."""
    w1b = jnp.asarray(w1, jnp.float32).astype(jnp.bfloat16)   # (hh, h*h) bf16
    b1c = jnp.asarray(b1, jnp.float32).reshape(-1, 1)         # (hh, 1)  f32
    w2c = jnp.asarray(w2, jnp.float32).reshape(-1, 1)         # (hh, 1)  f32
    b2c = jnp.asarray(b2, jnp.float32).reshape(1, 1)          # (1, 1)   f32
    return w1b, b1c, w2c, b2c


def critic_forward(x, w1b, b1c, w2c, b2c, *, tile_b=None, force_pallas=False):
    """x: (B, h*h) f32; w1b: (hh, h*h) bf16; b1c/w2c: (hh, 1); b2c: (1, 1)."""
    x = jnp.asarray(x, jnp.float32)
    batch, hsq = x.shape
    hh = w1b.shape[0]

    if not force_pallas and batch * hsq * 4 < _SMALL_PROBLEM_BYTES:
        # Small-problem fast path: pallas_call launch overhead would dominate.
        h1 = jnp.maximum(jnp.dot(x, w1b.astype(jnp.float32).T) + b1c[:, 0], 0.0)
        z = jnp.dot(h1, w2c) + b2c
        return jnp.mean(jax.nn.softplus(z))

    vmem_limit = _vmem_limit_bytes()
    if tile_b is None:
        tile_b = _pick_tile_b(batch, hsq, hh, vmem_limit)
    tile_b = max(8, _round_up(int(tile_b), 8))

    grid = pl.cdiv(batch, tile_b)

    kernel = functools.partial(_critic_kernel, tile_b=tile_b, batch=batch)
    partials = pl.pallas_call(
        kernel,
        out_shape=jax.ShapeDtypeStruct((grid, 8, 128), jnp.float32),
        grid=(grid,),
        in_specs=[
            pl.BlockSpec((tile_b, hsq), lambda i: (i, 0)),   # streamed f32 x blocks
            pl.BlockSpec((hh, hsq), lambda i: (0, 0)),       # resident weights
            pl.BlockSpec((hh, 1), lambda i: (0, 0)),
            pl.BlockSpec((hh, 1), lambda i: (0, 0)),
            pl.BlockSpec((1, 1), lambda i: (0, 0)),
        ],
        out_specs=pl.BlockSpec((1, 8, 128), lambda i: (i, 0, 0)),
        compiler_params=pltpu.CompilerParams(
            dimension_semantics=("parallel",),
            vmem_limit_bytes=vmem_limit,
        ),
    )(x, w1b, b1c, w2c, b2c)

    # tiny final reduce + divide by the true batch size (masked lanes contributed 0)
    return jnp.sum(partials[:, 0, 0]) / batch


def _torch_like_linear_init(kw, kb, out_f, in_f):
    # mimics nn.Linear default init: uniform(-1/sqrt(in), 1/sqrt(in))
    bound = 1.0 / jnp.sqrt(jnp.float32(in_f))
    w = jax.random.uniform(kw, (out_f, in_f), jnp.float32, -bound, bound)
    b = jax.random.uniform(kb, (out_f,), jnp.float32, -bound, bound)
    return w, b


if __name__ == "__main__":
    # Small shapes consistent with the module: h=4 -> feature dim h**2=16, hh=32, batch=8
    h, hh, batch = 4, 32, 8
    key = jax.random.PRNGKey(0)
    kx, k1w, k1b, k2w, k2b = jax.random.split(key, 5)

    x = jax.random.normal(kx, (batch, h * h), jnp.float32)
    w1, b1 = _torch_like_linear_init(k1w, k1b, hh, h * h)   # fc1: Linear(h**2, hh)
    w2, b2 = _torch_like_linear_init(k2w, k2b, 1, hh)       # fc2: Linear(hh, 1)

    params = prepare_params(w1, b1, w2, b2)

    # --- Pallas path at the demo shape (force past the small-problem fast path) ---
    y = critic_forward(x, *params, force_pallas=True)
    jax.block_until_ready(y)

    # Reference 1: f32 PyTorch-semantics reference (loose tol: kernel uses bf16
    # MXU operands with f32 accumulation).
    h1 = jnp.maximum(x @ w1.T + b1, 0.0)
    ref_f32 = jnp.mean(jax.nn.softplus(h1 @ w2.T + b2))
    assert jnp.allclose(y, ref_f32, rtol=2e-2, atol=2e-2), (y, ref_f32)

    # Reference 2: bf16-matched reference (tight tol) to validate the kernel math.
    h1b = jnp.maximum(
        jnp.dot(x.astype(jnp.bfloat16), w1.T.astype(jnp.bfloat16),
                preferred_element_type=jnp.float32) + b1, 0.0)
    zb = jnp.sum(h1b * w2, axis=-1, keepdims=True) + b2
    ref_bf16 = jnp.sum(jax.nn.softplus(zb)) / batch
    assert jnp.allclose(y, ref_bf16, rtol=2e-3, atol=5e-5), (y, ref_bf16)

    # --- Ragged multi-block grid (B=20, tile_b=16): exercises the in-kernel mask
    #     on Pallas' garbage rows of the last block (no wrapper-side padding). ---
    x2 = jax.random.normal(jax.random.PRNGKey(1), (20, h * h), jnp.float32)
    y2 = critic_forward(x2, *params, tile_b=16, force_pallas=True)
    jax.block_until_ready(y2)
    h1_2 = jnp.maximum(x2 @ w1.T + b1, 0.0)
    ref2 = jnp.mean(jax.nn.softplus(h1_2 @ w2.T + b2))
    assert jnp.allclose(y2, ref2, rtol=2e-2, atol=2e-2), (y2, ref2)

    # --- Auto tile pick, >=2 "parallel" grid steps, ragged tail (B=300) ---
    x3 = jax.random.normal(jax.random.PRNGKey(2), (300, h * h), jnp.float32)
    y3 = critic_forward(x3, *params, force_pallas=True)
    jax.block_until_ready(y3)
    h1_3 = jnp.maximum(x3 @ w1.T + b1, 0.0)
    ref3 = jnp.mean(jax.nn.softplus(h1_3 @ w2.T + b2))
    assert jnp.allclose(y3, ref3, rtol=2e-2, atol=2e-2), (y3, ref3)

    # --- Small-problem fast path (no pallas_call); same bf16 weights, loose tol ---
    y_fast = critic_forward(x, *params)
    jax.block_until_ready(y_fast)
    assert jnp.allclose(y_fast, ref_f32, rtol=2e-2, atol=2e-2), (y_fast, ref_f32)

    print("KERNEL_OK")
</pallas_src>

<mosaic_0001>
module attributes {stable_mosaic.version = 11 : i64} {
  func.func @_critic_kernel(%arg0: i32, %arg1: memref<8x16xf32, #tpu.memory_space<vmem>>, %arg2: memref<32x16xbf16, #tpu.memory_space<vmem>>, %arg3: memref<32x1xf32, #tpu.memory_space<vmem>>, %arg4: memref<32x1xf32, #tpu.memory_space<vmem>>, %arg5: memref<1x1xf32, #tpu.memory_space<vmem>>, %arg6: memref<1x8x128xf32, #tpu.memory_space<vmem>>) attributes {dimension_semantics = [#tpu.dimension_semantics<parallel>], iteration_bounds = array<i64: 1>, scalar_prefetch = 0 : i64, scratch_operands = 0 : i64, tpu.core_type = #tpu.core_type<tc>, window_params = [{transform_indices = @transform_0, window_bounds = array<i64: 8, 16>}, {pipeline_mode = #tpu.pipeline_mode<synchronous>, transform_indices = @transform_1, window_bounds = array<i64: 32, 16>}, {pipeline_mode = #tpu.pipeline_mode<synchronous>, transform_indices = @transform_2, window_bounds = array<i64: 32, 1>}, {pipeline_mode = #tpu.pipeline_mode<synchronous>, transform_indices = @transform_3, window_bounds = array<i64: 32, 1>}, {pipeline_mode = #tpu.pipeline_mode<synchronous>, transform_indices = @transform_4, window_bounds = array<i64: 1, 1>}, {transform_indices = @transform_5, window_bounds = array<i64: 1, 8, 128>}]} {
    %c0 = arith.constant 0 : index
    %c0_0 = arith.constant 0 : index
    %0 = vector.load %arg1[%c0, %c0_0] : memref<8x16xf32, #tpu.memory_space<vmem>>, vector<8x16xf32>
    %1 = arith.truncf %0 : vector<8x16xf32> to vector<8x16xbf16>
    %c0_1 = arith.constant 0 : index
    %c0_2 = arith.constant 0 : index
    %2 = vector.load %arg2[%c0_1, %c0_2] : memref<32x16xbf16, #tpu.memory_space<vmem>>, vector<32x16xbf16>
    %cst = arith.constant dense<0.000000e+00> : vector<32x8xf32>
    %3 = tpu.matmul %2, %1, %cst {dimension_numbers = #tpu.dot_dimension_numbers<[1], [1], [0], [0], [0, 0, 1, 0], [], []>} : vector<32x16xbf16>, vector<8x16xbf16>, vector<32x8xf32> -> vector<32x8xf32>
    %c0_3 = arith.constant 0 : index
    %c0_4 = arith.constant 0 : index
    %4 = vector.load %arg3[%c0_3, %c0_4] : memref<32x1xf32, #tpu.memory_space<vmem>>, vector<32x1xf32>
    %5 = vector.broadcast %4 : vector<32x1xf32> to vector<32x8xf32>
    %6 = arith.addf %3, %5 : vector<32x8xf32>
    %cst_5 = arith.constant 0.000000e+00 : f32
    %7 = vector.broadcast %cst_5 : f32 to vector<32x8xf32>
    %8 = arith.maximumf %6, %7 : vector<32x8xf32>
    %c0_6 = arith.constant 0 : index
    %c0_7 = arith.constant 0 : index
    %9 = vector.load %arg4[%c0_6, %c0_7] : memref<32x1xf32, #tpu.memory_space<vmem>>, vector<32x1xf32>
    %10 = vector.broadcast %9 : vector<32x1xf32> to vector<32x8xf32>
    %11 = arith.mulf %8, %10 : vector<32x8xf32>
    %cst_8 = arith.constant dense<0.000000e+00> : vector<8xf32>
    %12 = vector.multi_reduction <add>, %11, %cst_8 [0] : vector<32x8xf32> to vector<8xf32>
    %13 = vector.shape_cast %12 : vector<8xf32> to vector<1x8xf32>
    %c0_9 = arith.constant 0 : index
    %c0_10 = arith.constant 0 : index
    %14 = vector.load %arg5[%c0_9, %c0_10] : memref<1x1xf32, #tpu.memory_space<vmem>>, vector<1x1xf32>
    %15 = vector.broadcast %14 : vector<1x1xf32> to vector<1x8xf32>
    %16 = arith.addf %13, %15 : vector<1x8xf32>
    %17 = math.absf %16 : vector<1x8xf32>
    %cst_11 = arith.constant 0.000000e+00 : f32
    %18 = vector.broadcast %cst_11 : f32 to vector<1x8xf32>
    %19 = arith.subf %18, %17 : vector<1x8xf32>
    %20 = math.exp %19 : vector<1x8xf32>
    %21 = math.log1p %20 : vector<1x8xf32>
    %cst_12 = arith.constant 0.000000e+00 : f32
    %22 = vector.broadcast %cst_12 : f32 to vector<1x8xf32>
    %23 = arith.maximumf %16, %22 : vector<1x8xf32>
    %24 = arith.addf %21, %23 : vector<1x8xf32>
    %25 = tpu.iota {dimensions = array<i32: 1>} : vector<1x8xi32>
    %c8_i32 = arith.constant 8 : i32
    %26 = arith.muli %arg0, %c8_i32 : i32
    %c8_i32_13 = arith.constant 8 : i32
    %27 = arith.subi %c8_i32_13, %26 : i32
    %28 = vector.broadcast %27 : i32 to vector<1x8xi32>
    %29 = arith.cmpi slt, %25, %28 : vector<1x8xi32>
    %cst_14 = arith.constant 0.000000e+00 : f32
    %30 = vector.broadcast %cst_14 : f32 to vector<1x8xf32>
    %31 = arith.select %29, %24, %30 : vector<1x8xi1>, vector<1x8xf32>
    %32 = vector.shape_cast %31 : vector<1x8xf32> to vector<1x1x8xf32>
    %cst_15 = arith.constant dense<0.000000e+00> : vector<1xf32>
    %33 = vector.multi_reduction <add>, %32, %cst_15 [1, 2] : vector<1x1x8xf32> to vector<1xf32>
    %34 = vector.shape_cast %33 : vector<1xf32> to vector<1x1x1xf32>
    %35 = vector.extract %34[0, 0, 0] : f32 from vector<1x1x1xf32>
    %36 = vector.broadcast %35 : f32 to vector<1x8x128xf32>
    %c0_16 = arith.constant 0 : index
    %c0_17 = arith.constant 0 : index
    %c0_18 = arith.constant 0 : index
    %37 = vector.load %arg6[%c0_16, %c0_17, %c0_18] : memref<1x8x128xf32, #tpu.memory_space<vmem>>, vector<1x8x128xf32>
    tpu.vector_store %arg6[%c0_16, %c0_17, %c0_18], %36 {strides = array<i32>} : memref<1x8x128xf32, #tpu.memory_space<vmem>>, vector<1x8x128xf32>,
    return
  }
  func.func @transform_0(%arg0: i32) -> (i32, i32) {
    %c0_i32 = arith.constant 0 : i32
    %c0_i32_0 = arith.constant 0 : i32
    return %arg0, %c0_i32 : i32, i32
  }
  func.func @transform_1(%arg0: i32) -> (i32, i32) {
    %c0_i32 = arith.constant 0 : i32
    %c0_i32_0 = arith.constant 0 : i32
    %c0_i32_1 = arith.constant 0 : i32
    return %c0_i32, %c0_i32_0 : i32, i32
  }
  func.func @transform_2(%arg0: i32) -> (i32, i32) {
    %c0_i32 = arith.constant 0 : i32
    %c0_i32_0 = arith.constant 0 : i32
    %c0_i32_1 = arith.constant 0 : i32
    return %c0_i32, %c0_i32_0 : i32, i32
  }
  func.func @transform_3(%arg0: i32) -> (i32, i32) {
    %c0_i32 = arith.constant 0 : i32
    %c0_i32_0 = arith.constant 0 : i32
    %c0_i32_1 = arith.constant 0 : i32
    return %c0_i32, %c0_i32_0 : i32, i32
  }
  func.func @transform_4(%arg0: i32) -> (i32, i32) {
    %c0_i32 = arith.constant 0 : i32
    %c0_i32_0 = arith.constant 0 : i32
    %c0_i32_1 = arith.constant 0 : i32
    return %c0_i32, %c0_i32_0 : i32, i32
  }
  func.func @transform_5(%arg0: i32) -> (i32, i32, i32) {
    %c0_i32 = arith.constant 0 : i32
    %c0_i32_0 = arith.constant 0 : i32
    %c0_i32_1 = arith.constant 0 : i32
    return %arg0, %c0_i32, %c0_i32_0 : i32, i32, i32
  }
}

</mosaic_0001>

<llo_original>
// kernel: tpu_custom_call.1
$region0: #{tpu_custom_call.1}
  #allocation0 [shape = 'u32[]', space=smem, size = 0x4, offset = 0x4, fixed_abs, tag = 'smem constant byte address 0x4 - core index']
  #allocation1 [shape = 'u32[72,128]{1,0:T(1,128)}', space=vmem, size = 0x9000, scoped, tag = 'internal scratch']
  #allocation2 [shape = 'f32[1,1]{1,0:T(1,128)S(1)}', space=vmem, size = 0x200, scoped, tag = 'scoped memory for tpu_custom_call.1']
  %s0 = inlined_call_operand.vmem [shape: f32[8,16], index: 0, kind: input, shape index: {}]
  %s1 = inlined_call_operand.vmem [shape: bf16[32,16], index: 1, kind: input, shape index: {}]
  %s2 = inlined_call_operand.vmem [shape: f32[32,1], index: 2, kind: input, shape index: {}]
  %s3 = inlined_call_operand.vmem [shape: f32[32,1], index: 3, kind: input, shape index: {}]
  %s4 = inlined_call_operand.<no memory space> [shape: f32[1,1], index: 4, kind: input, shape index: {}]
  %s5 = inlined_call_operand.hbm [shape: f32[1,8,128], index: 5, kind: output, shape index: {}]
  %s6 = sld [smem:[#allocation0]]
  $region30: #{tpu_custom_call.1} parent=0
    _
  %s8 = ssub.s32 1, %s6
  %s9 = scalar_select 0, %s8, %s6
  %v10 = vstv %s4
  %11 = vst [vmem:[#allocation2] sm:$0x1] %v10
  $region1: #{tpu_custom_call.1} parent=0
    #allocation3 [shape = 'u8[4096]{0}', space=vmem, size = 0x1000, scoped, tag = 'output window, operand 0, single buffered']
    #allocation4 [shape = 's32[1]{0}', space=sflag, size = 0x4, scoped, tag = 'scoped memory for tpu_custom_call.1']
    %12 = vsyncpa [#allocation4], 0
    // Predicated region
    $region2: #{tpu_custom_call.1} parent=1 // pred_check
      _
    $region3: #{tpu_custom_call.1} parent=1 // pred_check_branch
      %14 = sbr.rel (0) target = $region5
    $region4: #{tpu_custom_call.1} parent=1 // pred_region
      _
    $region5: #{tpu_custom_call.1} parent=1 // pred_fallthru
      _
    // Predicated region
    $region6: #{tpu_custom_call.1} parent=1 // pred_check
      _
    $region7: #{tpu_custom_call.1} parent=1 // pred_check_branch
      %16 = sbr.rel (0) target = $region9
    $region8: #{tpu_custom_call.1} parent=1 // pred_region
      _
    $region9: #{tpu_custom_call.1} parent=1 // pred_fallthru
      _
    // Predicated region
    $region10: #{tpu_custom_call.1} parent=1 // pred_check
      _
    $region11: #{tpu_custom_call.1} parent=1 // pred_check_branch
      %18 = sbr.rel (0) target = $region13
    $region12: #{tpu_custom_call.1} parent=1 // pred_region
      _
    $region13: #{tpu_custom_call.1} parent=1 // pred_fallthru
      _
    // Predicated region
    $region14: #{tpu_custom_call.1} parent=1 // pred_check
      _
    $region15: #{tpu_custom_call.1} parent=1 // pred_check_branch
      %20 = sbr.rel (0) target = $region17
    $region16: #{tpu_custom_call.1} parent=1 // pred_region
      _
    $region17: #{tpu_custom_call.1} parent=1 // pred_fallthru
      _
    // Predicated region
    $region18: #{tpu_custom_call.1} parent=1 // pred_check
      _
    $region19: #{tpu_custom_call.1} parent=1 // pred_check_branch
      %22 = sbr.rel (0) target = $region21
    $region20: #{tpu_custom_call.1} parent=1 // pred_region
      _
    $region21: #{tpu_custom_call.1} parent=1 // pred_fallthru
      _
    %v24 = vld [vmem:[%s0] sm:$0xff]
    %v25 = vpack.c.bf16 %v24, %v24
    %v26 = vld [vmem:[%s1] sm:$0xf]
    %v27 = vld [vmem:[%s1 + $0x4] sm:$0xf]
    %v28 = vld [vmem:[%s1 + $0x8] sm:$0xf]
    %v29 = vld [vmem:[%s1 + $0xc] sm:$0xf]
    %v30 = vld [vmem:[%s2] sm:$0xff]
    %v31 = vld [vmem:[%s2 + $0x8] sm:$0xff]
    %v32 = vld [vmem:[%s2 + $0x10] sm:$0xff]
    %v33 = vld [vmem:[%s2 + $0x18] sm:$0xff]
    %35 = vset.pattern.permute.xlu0 0
    %36 = vperm.xlu0 %35, %v30
    %v37 = vpop.permute.xlu0 %36
    %40 = vset.pattern.permute.xlu0 0
    %41 = vperm.xlu0 %40, %v31
    %v42 = vpop.permute.xlu0 %41
    %45 = vset.pattern.permute.xlu0 0
    %46 = vperm.xlu0 %45, %v32
    %v47 = vpop.permute.xlu0 %46
    %50 = vset.pattern.permute.xlu0 0
    %51 = vperm.xlu0 %50, %v33
    %v52 = vpop.permute.xlu0 %51
    %v58 = vunpack.c.l.b16 %v26
    %v59 = vunpack.c.l.b16 %v27
    %v60 = vunpack.c.l.b16 %v28
    %v61 = vunpack.c.l.b16 %v29
    %v62 = vpack.c.b16 %v59, %v58
    %v63 = vpack.c.b16 %v61, %v60
    %vm64 = vcmask 130048
    %v66 = vsel %vm64, %v62, 0
    %v69 = vsel %vm64, %v63, 0
    %v72 = vsel %vm64, %v25, 0
    %74 = vmatpush.bf16.xpose.msra.mxu0 0
    %75 = vmatpush.bf16.xpose.msra.mxu0 0
    %76 = vmatpush.bf16.xpose.msra.mxu0 0
    %77 = vmatpush.bf16.xpose.msra.mxu0 0
    %78 = vmatpush.bf16.xpose.msra.mxu0 0
    %79 = vmatpush.bf16.xpose.msra.mxu0 0
    %80 = vmatpush.bf16.xpose.msra.mxu0 0
    %81 = vmatpush.bf16.xpose.msra.mxu0 %v72
    %82 = vmatmul.bf16.gmra.mxu0 %v66
    %v83 = vpop.f32.mrf.mxu0
    %v84 = vadd.f32 %v37, %v83
    %v85 = vpop.f32.mrf.mxu0
    %v86 = vadd.f32 %v42, %v85
    %87 = vmatmul.bf16.gmra.mxu0 %v69
    %v88 = vpop.f32.mrf.mxu0
    %v89 = vadd.f32 %v47, %v88
    %v90 = vpop.f32.mrf.mxu0
    %v91 = vadd.f32 %v52, %v90
    %92 = vdwg.mxu0
    %v93 = vmax.f32 %v84, 0.0
    %v94 = vmax.f32 %v86, 0.0
    %v95 = vmax.f32 %v89, 0.0
    %v96 = vmax.f32 %v91, 0.0
    %v97 = vld [vmem:[%s3] sm:$0xff]
    %v98 = vld [vmem:[%s3 + $0x8] sm:$0xff]
    %v99 = vld [vmem:[%s3 + $0x10] sm:$0xff]
    %v100 = vld [vmem:[%s3 + $0x18] sm:$0xff]
    %102 = vset.pattern.permute.xlu0 0
    %103 = vperm.xlu0 %102, %v97
    %v104 = vpop.permute.xlu0 %103
    %107 = vset.pattern.permute.xlu0 0
    %108 = vperm.xlu0 %107, %v98
    %v109 = vpop.permute.xlu0 %108
    %112 = vset.pattern.permute.xlu0 0
    %113 = vperm.xlu0 %112, %v99
    %v114 = vpop.permute.xlu0 %113
    %117 = vset.pattern.permute.xlu0 0
    %118 = vperm.xlu0 %117, %v100
    %v119 = vpop.permute.xlu0 %118
    %v121 = vmul.f32 %v93, %v104
    %v122 = vmul.f32 %v94, %v109
    %v123 = vmul.f32 %v95, %v114
    %v124 = vmul.f32 %v96, %v119
    %vm125 = vcmask 64512
    %v126 = vsel %vm125, %v121, 0.0
    %v127 = vsel %vm125, %v122, 0.0
    %v128 = vadd.f32 %v126, %v127
    %v129 = vsel %vm125, %v123, 0.0
    %v130 = vadd.f32 %v128, %v129
    %v131 = vsel %vm125, %v124, 0.0
    %v132 = vadd.f32 %v130, %v131
    %v133 = vrot.slane %v132, 4
    %v134 = vadd.f32 %v132, %v133
    %v135 = vrot.slane %v134, 2
    %v136 = vadd.f32 %v134, %v135
    %v137 = vrot.slane %v136, 1
    %v138 = vadd.f32 %v136, %v137
    %v139 = vld [vmem:[#allocation2] sm:$0x1]
    %141 = vset.pattern.permute.xlu0 0
    %142 = vperm.xlu0 %141, %v139
    %v143 = vpop.permute.xlu0 %142
    %v145 = vperm.slane %v143, 0
    %v146 = vadd.f32 %v138, %v145
    %v147 = vand.u32 2147483647, %v146
    %v148 = vsub.f32 0.0, %v147
    %v149 = vmul.f32 %v148, 1.442695
    %v150 = vpow.pop %v149
    %v151 = vadd.f32 %v150, 1.0
    %v152 = vlog2.pop %v151
    %v153 = vmul.f32 %v152, 0.6931472
    %v154 = vmul.f32 -0.5, %v150
    %v155 = vadd.f32 %v154, 1.0
    %v156 = vmul.f32 %v155, %v150
    %v157 = vand.u32 2147483647, %v150
    %vm158 = vcmp.lt.f32.partialorder %v157, 0.0004427343
    %v159 = vsel %vm158, %v156, %v153
    %v160 = vmax.f32 %v146, 0.0
    %v161 = vadd.f32 %v159, %v160
    %v162 = vlaneseq
    %v163 = vand.u32 %v162, 127
    %s164 = smul.u32 0, 8
    %s165 = ssub.s32 8, %s164
    %v166 = vstv %s165
    %vm167 = vcmp.lt.s32.totalorder %v163, %v166
    %v168 = vsel %vm167, %v161, 0.0
    %vm169 = vcmask 57344
    %v170 = vsel %vm169, %v168, 0.0
    %171 = vadd.xlane.f32.xlu0 %v170
    %v172 = vpop.xlane.xlu0 %171
    %v173 = vrot.slane %v172, 4
    %v174 = vadd.f32 %v172, %v173
    %v175 = vrot.slane %v174, 2
    %v176 = vadd.f32 %v174, %v175
    %v177 = vrot.slane %v176, 1
    %v178 = vadd.f32 %v176, %v177
    %s179 = vtos %v178
    %v180 = vstv %s179
    %181 = vst [vmem:[#allocation3] sm:$0xff] %v180
    // Predicated region
    $region22: #{tpu_custom_call.1} parent=1 // pred_check
      _
    $region23: #{tpu_custom_call.1} parent=1 // pred_check_branch
      %183 = sbr.rel (0) target = $region25
    $region24: #{tpu_custom_call.1} parent=1 // pred_region
      %185 = vsyncadd [#allocation4], 0
      %s187 = sshll.u32 [#allocation3], 4
      %s188 = int_to_ptr.vmem [resolvable:$true] %s187
      %s189 = sshll.u32 %s5, 4
      %s190 = int_to_ptr.hbm [resolvable:$true] %s189
      %192 = dma.vmem_to_hbm [thread:$0]  %s188, 128, %s190, [#allocation4]
    $region25: #{tpu_custom_call.1} parent=1 // pred_fallthru
      _
    // Predicated region
    $region26: #{tpu_custom_call.1} parent=1 // pred_check
      _
    $region27: #{tpu_custom_call.1} parent=1 // pred_check_branch
      %194 = sbr.rel (0) target = $region29
    $region28: #{tpu_custom_call.1} parent=1 // pred_region
      %196 = dma.done [#allocation4], 128
    $region29: #{tpu_custom_call.1} parent=1 // pred_fallthru
      _
    %197 = vsyncpa [#allocation4], 1

</llo_original>
